<compile_context>
chip_gen: v7x
topology: tpu7x:2x2x1
jax: 0.10.0
libtpu: 0.0.40
codegen_flags: <defaults>
</compile_context>

<pallas_src>
import functools

import jax
import jax.numpy as jnp
from jax.experimental import pallas as pl
from jax.experimental.pallas import tpu as pltpu


def _round_up(x: int, m: int) -> int:
    return ((x + m - 1) // m) * m


def _pick_tile(dim: int, pref: int, align: int) -> tuple[int, int]:
    """Return (tile, padded_dim) with minimal padding.

    dim <= pref : single full-dim block, zero padding (full-dim blocks are
                  always legal w.r.t. the (8,128) BlockSpec rule).
    dim >  pref : pad only up to the next multiple of `align`, then take the
                  largest multiple of `align` <= pref that divides it.
    """
    if dim <= pref:
        return dim, dim
    padded = _round_up(dim, align)
    tile = (pref // align) * align
    while padded % tile != 0:
        tile -= align
    return tile, padded


def _maybe_split_m(B: int, tm: int, m_pad: int, gn: int, *, sublane: int,
                   max_overhead: float = 0.15) -> tuple[int, int]:
    """Ensure >=2 parallel (M, N) tiles for v7x's two TensorCores when the
    extra M padding it costs is small; no-op otherwise."""
    gm = m_pad // tm
    if gm * gn >= 2:
        return tm, m_pad
    tm2 = _round_up(-(-B // 2), sublane)
    m2 = 2 * tm2
    if tm2 >= sublane and (m2 - B) / B <= max_overhead:
        return tm2, m2
    return tm, m_pad


def _linear_kernel(x_ref, w_ref, b_ref, o_ref, acc_ref):
    # x_ref: [tm, tk] (bf16), w_ref: [tk, tn] (bf16, W^T layout),
    # b_ref: [1, tn] f32, o_ref: [tm, tn], acc_ref: [tm, tn] f32 scratch.
    k = pl.program_id(2)

    @pl.when(k == 0)
    def _init():
        acc_ref[...] = jnp.zeros_like(acc_ref)

    acc_ref[...] += jnp.dot(x_ref[...], w_ref[...],
                            preferred_element_type=jnp.float32)

    @pl.when(k == pl.num_programs(2) - 1)
    def _finalize():
        o_ref[...] = (acc_ref[...] + b_ref[...]).astype(o_ref.dtype)


@functools.partial(jax.jit,
                   static_argnames=("tm_pref", "tn_pref", "tk_pref",
                                    "compute_dtype"))
def lr_forward(x, weight, bias, *, tm_pref=512, tn_pref=512, tk_pref=1024,
               compute_dtype=jnp.bfloat16):
    """Pallas equivalent of LR.forward (torch.nn.Linear: y = x @ W^T + b).

    x:      [B, D_in]      float32
    weight: [D_out, D_in]  (torch nn.Linear layout)
    bias:   [D_out]
    returns [B, D_out]     in x.dtype (f32), accumulation always f32.
    """
    B, d_in = x.shape
    d_out, d_in_w = weight.shape
    assert d_in_w == d_in, "weight/input feature mismatch"
    assert bias.shape == (d_out,)

    out_dtype = x.dtype
    cdt = jnp.dtype(compute_dtype)
    sublane = 16 if cdt.itemsize == 2 else 8

    # --- tile selection: minimal padding, full-dim blocks when they fit ---
    tm, m_pad = _pick_tile(B, tm_pref, sublane)
    tn, n_pad = _pick_tile(d_out, tn_pref, 128)
    tk, k_pad = _pick_tile(d_in, tk_pref, 128)
    tm, m_pad = _maybe_split_m(B, tm, m_pad, n_pad // tn, sublane=sublane)

    grid = (m_pad // tm, n_pad // tn, k_pad // tk)
    gm, gn, gk = grid

    # --- input conversion / minimal padding (plain-JAX glue; fuses under jit) ---
    xp = x.astype(cdt)
    if (m_pad, k_pad) != (B, d_in):
        xp = jnp.pad(xp, ((0, m_pad - B), (0, k_pad - d_in)))
    # Feed W as [K, N]: transpose fuses with the bf16 cast (one pass over W),
    # and the kernel never needs an in-kernel transpose of the weight tile.
    wp = weight.T.astype(cdt)
    if (k_pad, n_pad) != (d_in, d_out):
        wp = jnp.pad(wp, ((0, k_pad - d_in), (0, n_pad - d_out)))
    bp = bias.astype(jnp.float32).reshape(1, d_out)
    if n_pad != d_out:
        bp = jnp.pad(bp, ((0, 0), (0, n_pad - d_out)))

    # --- cost estimate including re-streaming ---
    csz = cdt.itemsize
    osz = jnp.dtype(out_dtype).itemsize
    bytes_accessed = (m_pad * k_pad * csz * gn        # x re-read per N tile
                      + k_pad * n_pad * csz * gm      # W re-read per M tile
                      + m_pad * n_pad * osz           # output written once
                      + n_pad * 4 * gm)               # bias row per M tile
    cost = pl.CostEstimate(flops=2 * m_pad * n_pad * k_pad,
                           transcendentals=0,
                           bytes_accessed=bytes_accessed)

    # --- VMEM budget: double-buffered x/W/out tiles + f32 acc + bias ---
    vmem_est = (2 * (tm * tk + tk * tn) * csz
                + 2 * tm * tn * osz
                + tm * tn * 4
                + 4 * tn * 4)
    vmem_limit = max(32 << 20, min(int(1.5 * vmem_est), 48 << 20))

    out_pad = pl.pallas_call(
        _linear_kernel,
        out_shape=jax.ShapeDtypeStruct((m_pad, n_pad), out_dtype),
        grid_spec=pltpu.PrefetchScalarGridSpec(
            num_scalar_prefetch=0,
            grid=grid,
            in_specs=[
                pl.BlockSpec((tm, tk), lambda i, j, k: (i, k)),   # x tile
                pl.BlockSpec((tk, tn), lambda i, j, k: (k, j)),   # W^T tile
                pl.BlockSpec((1, tn), lambda i, j, k: (0, j)),    # bias row
            ],
            out_specs=pl.BlockSpec((tm, tn), lambda i, j, k: (i, j)),
            scratch_shapes=[pltpu.VMEM((tm, tn), jnp.float32)],
        ),
        compiler_params=pltpu.CompilerParams(
            dimension_semantics=("parallel", "parallel", "arbitrary"),
            vmem_limit_bytes=vmem_limit,
        ),
        cost_estimate=cost,
    )(xp, wp, bp)

    if (m_pad, n_pad) != (B, d_out):
        out_pad = out_pad[:B, :d_out]
    return out_pad


if __name__ == "__main__":
    key = jax.random.PRNGKey(0)

    def ref_linear_quant(x, w, b, dt=jnp.bfloat16):
        # Reference with the same bf16 input quantization, f32 accumulation.
        xq = x.astype(dt).astype(jnp.float32)
        wq = w.astype(dt).astype(jnp.float32)
        return xq @ wq.T + b

    # Case 1: the literal course module — LR(input_size=2, output_size=1),
    # small batch whose first row is the spec's x = [[1.0, 2.0]].
    input_size, output_size, batch = 2, 1, 4
    k1, k2, k3, key = jax.random.split(key, 4)
    w1 = jax.random.normal(k1, (output_size, input_size), jnp.float32) * 0.5
    b1 = jax.random.normal(k2, (output_size,), jnp.float32) * 0.1
    x1 = jnp.concatenate(
        [jnp.array([[1.0, 2.0]], jnp.float32),
         jax.random.normal(k3, (batch - 1, input_size), jnp.float32)], axis=0)

    out1 = jax.block_until_ready(lr_forward(x1, w1, b1))
    assert out1.shape == (batch, output_size)
    assert jnp.allclose(out1, ref_linear_quant(x1, w1, b1), atol=1e-3, rtol=1e-3)
    assert jnp.allclose(out1, x1 @ w1.T + b1, atol=3e-2, rtol=3e-2)

    # Case 2: a larger Linear exercising the multi-M grid (v7x split), the
    # zero-padding full-dim N=320 / K=384 blocks, and the bias finalize path.
    B2, D_in2, D_out2 = 200, 384, 320
    k4, k5, k6 = jax.random.split(key, 3)
    w2 = jax.random.normal(k4, (D_out2, D_in2), jnp.float32) * 0.05
    b2 = jax.random.normal(k5, (D_out2,), jnp.float32) * 0.1
    x2 = jax.random.normal(k6, (B2, D_in2), jnp.float32)

    out2 = jax.block_until_ready(lr_forward(x2, w2, b2))
    assert out2.shape == (B2, D_out2)
    assert jnp.allclose(out2, ref_linear_quant(x2, w2, b2), atol=2e-3, rtol=2e-3)
    assert jnp.allclose(out2, x2 @ w2.T + b2, atol=5e-2, rtol=5e-2)

    print("KERNEL_OK")
</pallas_src>

<mosaic_0001>
module attributes {stable_mosaic.version = 11 : i64} {
  func.func @_linear_kernel(%arg0: i32, %arg1: i32, %arg2: i32, %arg3: memref<4x2xbf16, #tpu.memory_space<vmem>>, %arg4: memref<2x1xbf16, #tpu.memory_space<vmem>>, %arg5: memref<1x1xf32, #tpu.memory_space<vmem>>, %arg6: memref<4x1xf32, #tpu.memory_space<vmem>>, %arg7: memref<4x1xf32, #tpu.memory_space<vmem>>) attributes {dimension_semantics = [#tpu.dimension_semantics<parallel>, #tpu.dimension_semantics<parallel>, #tpu.dimension_semantics<arbitrary>], iteration_bounds = array<i64: 1, 1, 1>, scalar_prefetch = 0 : i64, scratch_operands = 1 : i64, tpu.core_type = #tpu.core_type<tc>, window_params = [{transform_indices = @transform_0, window_bounds = array<i64: 4, 2>}, {transform_indices = @transform_1, window_bounds = array<i64: 2, 1>}, {transform_indices = @transform_2, window_bounds = array<i64: 1, 1>}, {transform_indices = @transform_3, window_bounds = array<i64: 4, 1>}]} {
    %c0_i32 = arith.constant 0 : i32
    %0 = arith.cmpi eq, %arg2, %c0_i32 : i32
    %1 = arith.extui %0 : i1 to i32
    %c0_i32_0 = arith.constant 0 : i32
    %2 = arith.cmpi ne, %1, %c0_i32_0 : i32
    scf.if %2 {
      %cst_10 = arith.constant 0.000000e+00 : f32
      %12 = vector.broadcast %cst_10 : f32 to vector<4x1xf32>
      %c0_11 = arith.constant 0 : index
      %c0_12 = arith.constant 0 : index
      %13 = vector.load %arg7[%c0_11, %c0_12] : memref<4x1xf32, #tpu.memory_space<vmem>>, vector<4x1xf32>
      tpu.vector_store %arg7[%c0_11, %c0_12], %12 {strides = array<i32>} : memref<4x1xf32, #tpu.memory_space<vmem>>, vector<4x1xf32>,
    } else {
    }
    %c0 = arith.constant 0 : index
    %c0_1 = arith.constant 0 : index
    %3 = vector.load %arg7[%c0, %c0_1] : memref<4x1xf32, #tpu.memory_space<vmem>>, vector<4x1xf32>
    %c0_2 = arith.constant 0 : index
    %c0_3 = arith.constant 0 : index
    %4 = vector.load %arg3[%c0_2, %c0_3] : memref<4x2xbf16, #tpu.memory_space<vmem>>, vector<4x2xbf16>
    %c0_4 = arith.constant 0 : index
    %c0_5 = arith.constant 0 : index
    %5 = vector.load %arg4[%c0_4, %c0_5] : memref<2x1xbf16, #tpu.memory_space<vmem>>, vector<2x1xbf16>
    %cst = arith.constant dense<0.000000e+00> : vector<4x1xf32>
    %6 = tpu.matmul %4, %5, %cst {dimension_numbers = #tpu.dot_dimension_numbers<[1], [0], [0], [1], [0, 0, 1, 1], [], []>} : vector<4x2xbf16>, vector<2x1xbf16>, vector<4x1xf32> -> vector<4x1xf32>
    %7 = arith.addf %3, %6 : vector<4x1xf32>
    %c0_6 = arith.constant 0 : index
    %c0_7 = arith.constant 0 : index
    %8 = vector.load %arg7[%c0_6, %c0_7] : memref<4x1xf32, #tpu.memory_space<vmem>>, vector<4x1xf32>
    tpu.vector_store %arg7[%c0_6, %c0_7], %7 {strides = array<i32>} : memref<4x1xf32, #tpu.memory_space<vmem>>, vector<4x1xf32>,
    %c0_i32_8 = arith.constant 0 : i32
    %9 = arith.cmpi eq, %arg2, %c0_i32_8 : i32
    %10 = arith.extui %9 : i1 to i32
    %c0_i32_9 = arith.constant 0 : i32
    %11 = arith.cmpi ne, %10, %c0_i32_9 : i32
    scf.if %11 {
      %c0_10 = arith.constant 0 : index
      %c0_11 = arith.constant 0 : index
      %12 = vector.load %arg7[%c0_10, %c0_11] : memref<4x1xf32, #tpu.memory_space<vmem>>, vector<4x1xf32>
      %c0_12 = arith.constant 0 : index
      %c0_13 = arith.constant 0 : index
      %13 = vector.load %arg5[%c0_12, %c0_13] : memref<1x1xf32, #tpu.memory_space<vmem>>, vector<1x1xf32>
      %14 = vector.broadcast %13 : vector<1x1xf32> to vector<4x1xf32>
      %15 = arith.addf %12, %14 : vector<4x1xf32>
      %c0_14 = arith.constant 0 : index
      %c0_15 = arith.constant 0 : index
      %16 = vector.load %arg6[%c0_14, %c0_15] : memref<4x1xf32, #tpu.memory_space<vmem>>, vector<4x1xf32>
      tpu.vector_store %arg6[%c0_14, %c0_15], %15 {strides = array<i32>} : memref<4x1xf32, #tpu.memory_space<vmem>>, vector<4x1xf32>,
    } else {
    }
    return
  }
  func.func @transform_0(%arg0: i32, %arg1: i32, %arg2: i32) -> (i32, i32) {
    %c0_i32 = arith.constant 0 : i32
    return %arg0, %arg2 : i32, i32
  }
  func.func @transform_1(%arg0: i32, %arg1: i32, %arg2: i32) -> (i32, i32) {
    %c0_i32 = arith.constant 0 : i32
    return %arg2, %arg1 : i32, i32
  }
  func.func @transform_2(%arg0: i32, %arg1: i32, %arg2: i32) -> (i32, i32) {
    %c0_i32 = arith.constant 0 : i32
    %c0_i32_0 = arith.constant 0 : i32
    return %c0_i32, %arg1 : i32, i32
  }
  func.func @transform_3(%arg0: i32, %arg1: i32, %arg2: i32) -> (i32, i32) {
    %c0_i32 = arith.constant 0 : i32
    return %arg0, %arg1 : i32, i32
  }
}

</mosaic_0001>

<llo_original>
// kernel: lr_forward.1
$region0: #{lr_forward.1}
  #allocation0 [shape = 'u32[]', space=smem, size = 0x4, offset = 0x4, fixed_abs, tag = 'smem constant byte address 0x4 - core index']
  #allocation1 [shape = 'u32[144,128]{1,0:T(1,128)}', space=vmem, size = 0x12000, scoped, tag = 'internal scratch']
  #allocation2 [shape = 'f32[4,1]{1,0:T(4,128)}', space=vmem, size = 0x800, scoped, tag = 'scratch operand']
  #allocation3 [shape = 'f32[1,1]{1,0:T(1,128)S(1)}', space=vmem, size = 0x200, scoped, tag = 'scoped memory for lr_forward.1']
  %s0 = inlined_call_operand.vmem [shape: bf16[4,2], index: 0, kind: input, shape index: {}]
  %s1 = inlined_call_operand.vmem [shape: bf16[2,1], index: 1, kind: input, shape index: {}]
  %s2 = inlined_call_operand.<no memory space> [shape: f32[1,1], index: 2, kind: input, shape index: {}]
  %s3 = inlined_call_operand.vmem [shape: f32[4,1], index: 3, kind: output, shape index: {}]
  %s4 = sld [smem:[#allocation0]]
  $region30: #{lr_forward.1} parent=0
    _
  %s6 = ssub.s32 1, %s4
  %s7 = scalar_select 0, %s6, %s4
  %v8 = vstv %s2
  %9 = vst [vmem:[#allocation3] sm:$0x1] %v8
  // Predicated region
  $region2: #{lr_forward.1} parent=0 // pred_check
    _
  $region3: #{lr_forward.1} parent=0 // pred_check_branch
    %11 = sbr.rel (0) target = $region5
  $region4: #{lr_forward.1} parent=0 // pred_region
    _
  $region5: #{lr_forward.1} parent=0 // pred_fallthru
    _
  // Predicated region
  $region6: #{lr_forward.1} parent=0 // pred_check
    _
  $region7: #{lr_forward.1} parent=0 // pred_check_branch
    %13 = sbr.rel (0) target = $region9
  $region8: #{lr_forward.1} parent=0 // pred_region
    _
  $region9: #{lr_forward.1} parent=0 // pred_fallthru
    _
  // Predicated region
  $region10: #{lr_forward.1} parent=0 // pred_check
    _
  $region11: #{lr_forward.1} parent=0 // pred_check_branch
    %15 = sbr.rel (0) target = $region13
  $region12: #{lr_forward.1} parent=0 // pred_region
    _
  $region13: #{lr_forward.1} parent=0 // pred_fallthru
    _
  %p17 = scmp.eq.s32.totalorder 0, 0
  // Predicated region
  $region14: #{lr_forward.1} parent=0 // pred_check
    %p18 = pneg %p17
  $region15: #{lr_forward.1} parent=0 // pred_check_branch
    %20 = sbr.rel (%p18) target = $region17
  $region16: #{lr_forward.1} parent=0 // pred_region
    %vm21 = vcmask 3072
    %22 = vst.msk [vmem:[#allocation2] sm:$0xf] %vm21, 0.0
  $region17: #{lr_forward.1} parent=0 // pred_fallthru
    _
  %v23 = vld [vmem:[#allocation2] sm:$0xf]
  %v24 = vld [vmem:[%s0] sm:$0x3]
  %v25 = vld [vmem:[%s1] sm:$0x1]
  %vm26 = vcmask 15360
  %v28 = vsel %vm26, %v24, 0
  %vm30 = vcmask 1040384
  %v32 = vsel %vm30, %v25, 0
  %34 = vmatprep.subr.bf16.mxu0 0
  %35 = vmatpush1.bf16.msra.mxu0 %v32
  %36 = vmatprep.subr.bf16.mxu0 0
  %37 = vmatpush1.bf16.msra.mxu0 0
  %38 = vmatprep.subr.bf16.mxu0 0
  %39 = vmatpush1.bf16.msra.mxu0 0
  %40 = vmatprep.subr.bf16.mxu0 0
  %41 = vmatpush1.bf16.msra.mxu0 0
  %42 = vmatprep.subr.bf16.mxu0 0
  %43 = vmatpush1.bf16.msra.mxu0 0
  %44 = vmatprep.subr.bf16.mxu0 0
  %45 = vmatpush1.bf16.msra.mxu0 0
  %46 = vmatprep.subr.bf16.mxu0 0
  %47 = vmatpush1.bf16.msra.mxu0 0
  %48 = vmatprep.subr.bf16.mxu0 0
  %49 = vmatpush1.bf16.msra.mxu0 0
  %50 = vmatprep.subr.bf16.mxu0 0
  %51 = vmatpush1.bf16.msra.mxu0 0
  %52 = vmatprep.subr.bf16.mxu0 0
  %53 = vmatpush1.bf16.msra.mxu0 0
  %54 = vmatprep.subr.bf16.mxu0 0
  %55 = vmatpush1.bf16.msra.mxu0 0
  %56 = vmatprep.subr.bf16.mxu0 0
  %57 = vmatpush1.bf16.msra.mxu0 0
  %58 = vmatprep.subr.bf16.mxu0 0
  %59 = vmatpush1.bf16.msra.mxu0 0
  %60 = vmatprep.subr.bf16.mxu0 0
  %61 = vmatpush1.bf16.msra.mxu0 0
  %62 = vmatprep.subr.bf16.mxu0 0
  %63 = vmatpush1.bf16.msra.mxu0 0
  %64 = vmatprep.subr.bf16.mxu0 0
  %65 = vmatpush1.bf16.msra.mxu0 0
  %66 = vmatprep.mubr.bf16.mxu0 0
  %67 = vmatmul.mubr.bf16.gmra.mrb[0].mxu0 %v28
  %v68 = vpop.f32.mrb[0].mxu0
  %v69 = vadd.f32 0.0, %v68
  %v70 = vpop.f32.mrb[0].mxu0
  %v71 = vpop.f32.mrb[0].mxu0
  %v72 = vpop.f32.mrb[0].mxu0
  %73 = vdwg.mxu0
  %v74 = vadd.f32 %v23, %v69
  %vm75 = vcmask 3072
  %76 = vst.msk [vmem:[#allocation2] sm:$0xf] %vm75, %v74
  // Predicated region
  $region18: #{lr_forward.1} parent=0 // pred_check
    %p77 = pneg %p17
  $region19: #{lr_forward.1} parent=0 // pred_check_branch
    %79 = sbr.rel (%p77) target = $region21
  $region20: #{lr_forward.1} parent=0 // pred_region
    %v80 = vld [vmem:[#allocation2] sm:$0xf]
    %v81 = vld [vmem:[#allocation3] sm:$0x1]
    %v83 = vlaneseq
    %v84 = vshrl.u32 %v83, 7
    %v85 = vsub.s32 0, %v84
    %v86 = vrot.slane %v81, %v85
    %v88 = vadd.f32 %v80, %v86
    %89 = vst.msk [vmem:[%s3] sm:$0xf] %vm75, %v88
  $region21: #{lr_forward.1} parent=0 // pred_fallthru
    _
  // Predicated region
  $region22: #{lr_forward.1} parent=0 // pred_check
    _
  $region23: #{lr_forward.1} parent=0 // pred_check_branch
    %91 = sbr.rel (0) target = $region25
  $region24: #{lr_forward.1} parent=0 // pred_region
    _
  $region25: #{lr_forward.1} parent=0 // pred_fallthru
    _
  // Predicated region
  $region26: #{lr_forward.1} parent=0 // pred_check
    _
  $region27: #{lr_forward.1} parent=0 // pred_check_branch
    %93 = sbr.rel (0) target = $region29
  $region28: #{lr_forward.1} parent=0 // pred_region
    _
  $region29: #{lr_forward.1} parent=0 // pred_fallthru
    _

</llo_original>
